<compile_context>
chip_gen: v5e
topology: v5e:2x2
jax: 0.10.0
libtpu: 0.0.40
codegen_flags: <defaults>
</compile_context>

<pallas_src>
import jax
import jax.numpy as jnp
from jax.experimental import pallas as pl
from jax.experimental.pallas import tpu as pltpu

BN_EPS = 1e-5
_MIB = 1024 * 1024


def _cfirst_matmul(wt, x):
    """wt: (C_out, C_in), x: (C_in, tile_hw) -> (C_out, tile_hw) f32."""
    c_in = x.shape[0]
    if c_in <= 4:
        # Unrolled VPU broadcast-FMA: avoids a <1%-utilized MXU matmul.
        acc = (wt[:, 0:1] * x[0:1, :]).astype(jnp.float32)
        for c in range(1, c_in):
            acc = acc + wt[:, c:c + 1] * x[c:c + 1, :]
        return acc
    return jnp.dot(wt, x, preferred_element_type=jnp.float32)


# ---------------------------------------------------------------------------
# Pass 1: batch statistics of Y = W @ X, accumulated in resident output blocks.
# Grid = (N, hw_par, hw_inner); stats blocks depend only on (n, p).
# ---------------------------------------------------------------------------
def _conv1x1_stats_kernel(x_ref, wt_ref, sum_ref, sumsq_ref):
    @pl.when(pl.program_id(2) == 0)
    def _():
        sum_ref[...] = jnp.zeros_like(sum_ref)
        sumsq_ref[...] = jnp.zeros_like(sumsq_ref)

    y = _cfirst_matmul(wt_ref[...], x_ref[...])            # (C_out, tile_hw) f32
    sum_ref[...] += jnp.sum(y, axis=1, keepdims=True)      # (C_out, 1) sublane-major
    sumsq_ref[...] += jnp.sum(y * y, axis=1, keepdims=True)


# ---------------------------------------------------------------------------
# Pass 2: fused 1x1 conv (BN scale folded into W) + bias + ReLU.
# ---------------------------------------------------------------------------
def _conv1x1_bn_relu_kernel(x_ref, w_eff_ref, bias_ref, o_ref):
    y = _cfirst_matmul(w_eff_ref[...], x_ref[...])         # (C_out, tile_hw) f32
    o_ref[...] = jnp.maximum(y + bias_ref[...], 0.0)       # bias (C_out,1) bcasts over lanes


def _vmem_capacity_bytes():
    """Per-TensorCore VMEM; conservative fallback = v7x (64 MiB)."""
    try:
        cap = int(getattr(pltpu.get_tpu_info(), "vmem_capacity_bytes", 0))
        if cap > 0:
            return cap
    except Exception:
        pass
    return 64 * _MIB


def _pick_tile_hw(hw, c_in, c_out, vmem_cap):
    """Largest spatial tile fitting ~VMEM/4: double-buffered x + out blocks plus
    the f32 (C_out, tile_hw) intermediate.  Multiple of 128 (lane-dense) unless
    the whole extent fits, in which case a full-extent block is used."""
    bytes_per_lane = 4 * (2 * c_in + 2 * c_out + c_out)
    budget = vmem_cap // 4                      # ~16 MiB on v7x, ~32 MiB on v5e/v6e
    max_lanes = max(128, (budget // bytes_per_lane) // 128 * 128)
    if hw <= max_lanes:
        return hw                               # full-extent block: no 128 constraint
    return max_lanes                            # multiple of 128; wrapper pads H*W


def conv1x1_bn_relu(x_nchw, w_oi, gamma, beta, *, tile_hw=None):
    """x_nchw: (N, C_in, H, W) f32; w_oi: (C_out, C_in) (PyTorch 1x1 conv weight
    with trailing 1x1 squeezed); gamma/beta: (C_out,)."""
    N, C_in, H, W = x_nchw.shape
    C_out = w_oi.shape[0]
    HW = H * W
    M = N * HW

    vmem_cap = _vmem_capacity_bytes()
    if tile_hw is None:
        tile_hw = _pick_tile_hw(HW, C_in, C_out, vmem_cap)

    # NCHW is already channels-first per image: pure reshape, no transpose.
    x = x_nchw.reshape(N, C_in, HW)
    if HW % tile_hw != 0:
        # Ragged tail: zero-pad the spatial axis.  Zeros add nothing to the
        # pass-1 sums; the padded pass-2 columns are sliced off below.
        hw_pad = (-(-HW // tile_hw)) * tile_hw
        x = jnp.pad(x, ((0, 0), (0, 0), (0, hw_pad - HW)))
    else:
        hw_pad = HW
    n_hw = hw_pad // tile_hw

    wt = w_oi.astype(jnp.float32)               # (C_out, C_in)

    # Explicit, generation-aware VMEM limit (leave headroom).
    block_bytes = 4 * (2 * C_in + 2 * C_out + C_out) * tile_hw
    vmem_limit = int(min(vmem_cap * 3 // 4, max(32 * _MIB, 2 * block_bytes)))

    # ---- Pass 1: resident-accumulator batch stats ----
    # Keep >= 2 parallel blocks when N == 1 so both v7x TensorCores are used.
    hw_par = 2 if (N == 1 and n_hw >= 2 and n_hw % 2 == 0) else 1
    hw_inner = n_hw // hw_par

    psum, psumsq = pl.pallas_call(
        _conv1x1_stats_kernel,
        out_shape=(
            jax.ShapeDtypeStruct((N, hw_par, C_out, 1), jnp.float32),
            jax.ShapeDtypeStruct((N, hw_par, C_out, 1), jnp.float32),
        ),
        grid_spec=pltpu.PrefetchScalarGridSpec(
            num_scalar_prefetch=0,
            grid=(N, hw_par, hw_inner),
            in_specs=[
                pl.BlockSpec((None, C_in, tile_hw),
                             lambda n, p, j: (n, 0, p * hw_inner + j)),
                pl.BlockSpec((C_out, C_in), lambda n, p, j: (0, 0)),
            ],
            out_specs=[
                pl.BlockSpec((None, None, C_out, 1), lambda n, p, j: (n, p, 0, 0)),
                pl.BlockSpec((None, None, C_out, 1), lambda n, p, j: (n, p, 0, 0)),
            ],
        ),
        compiler_params=pltpu.CompilerParams(
            dimension_semantics=("parallel", "parallel", "arbitrary"),
            vmem_limit_bytes=vmem_limit),
    )(x, wt)

    # ---- Tiny per-channel scalar math (plain JAX glue) ----
    sum_y = jnp.sum(psum, axis=(0, 1)).reshape(C_out)
    sumsq_y = jnp.sum(psumsq, axis=(0, 1)).reshape(C_out)
    mean = sum_y / M
    # TODO(synk): E[y^2]-E[y]^2 can cancel catastrophically for |mean| >> std;
    # a centered two-pass variance would need a third read of X.
    var = jnp.maximum(sumsq_y / M - mean * mean, 0.0)      # biased var (BN training mode)
    invstd = jax.lax.rsqrt(var + BN_EPS)
    scale = gamma.astype(jnp.float32) * invstd
    bias = (beta.astype(jnp.float32) - mean * scale).reshape(C_out, 1)
    w_eff = wt * scale.reshape(C_out, 1)                   # fold BN scale into the conv weight

    # ---- Pass 2: fused conv (scale-folded) + bias + ReLU (lane-dense output) ----
    out = pl.pallas_call(
        _conv1x1_bn_relu_kernel,
        out_shape=jax.ShapeDtypeStruct((N, C_out, hw_pad), jnp.float32),
        grid_spec=pltpu.PrefetchScalarGridSpec(
            num_scalar_prefetch=0,
            grid=(N, n_hw),
            in_specs=[
                pl.BlockSpec((None, C_in, tile_hw), lambda n, j: (n, 0, j)),
                pl.BlockSpec((C_out, C_in), lambda n, j: (0, 0)),
                pl.BlockSpec((C_out, 1), lambda n, j: (0, 0)),
            ],
            out_specs=pl.BlockSpec((None, C_out, tile_hw), lambda n, j: (n, 0, j)),
        ),
        compiler_params=pltpu.CompilerParams(
            dimension_semantics=("parallel", "parallel"),
            vmem_limit_bytes=vmem_limit),
    )(x, w_eff, bias)

    if hw_pad != HW:
        out = out[:, :, :HW]
    return out.reshape(N, C_out, H, W)          # already NCHW: pure reshape, no transpose


def _reference(x_nchw, w_oi, gamma, beta):
    """Pure-JAX reference: 1x1 conv -> BatchNorm (batch stats, biased var) -> ReLU."""
    y = jnp.einsum('oc,nchw->nohw', w_oi, x_nchw,
                   precision=jax.lax.Precision.HIGHEST)
    mean = y.mean(axis=(0, 2, 3), keepdims=True)
    var = y.var(axis=(0, 2, 3), keepdims=True)             # biased
    yn = (y - mean) * jax.lax.rsqrt(var + BN_EPS)
    yn = yn * gamma.reshape(1, -1, 1, 1) + beta.reshape(1, -1, 1, 1)
    return jnp.maximum(yn, 0.0)


if __name__ == "__main__":
    # Module config: Conv1x1(channel_in=4, channel_out=8, bias=False, active='nn.ReLU')
    N, C_in, C_out, H, W = 2, 4, 8, 16, 16

    key = jax.random.PRNGKey(0)
    kx, kw = jax.random.split(key)

    x = jax.random.normal(kx, (N, C_in, H, W), dtype=jnp.float32)
    # Conv weight (C_out, C_in, 1, 1) in PyTorch -> stored here as (C_out, C_in).
    w = jax.random.normal(kw, (C_out, C_in), dtype=jnp.float32) * 0.1
    # Fresh nn.SyncBatchNorm affine init: gamma=1, beta=0.
    gamma = jnp.ones((C_out,), dtype=jnp.float32)
    beta = jnp.zeros((C_out,), dtype=jnp.float32)

    out = conv1x1_bn_relu(x, w, gamma, beta)
    out = jax.block_until_ready(out)
    assert out.shape == (N, C_out, H, W)

    ref = jax.block_until_ready(_reference(x, w, gamma, beta))
    err = float(jnp.max(jnp.abs(out - ref)))
    assert err < 1e-4, f"max abs error {err}"

    # TODO(synk): SyncBatchNorm running-mean/var momentum update and cross-replica
    # stat sync are not produced; only the single-replica normalized forward output.
    print("KERNEL_OK")
</pallas_src>

<mosaic_0001>
module attributes {stable_mosaic.version = 11 : i64} {
  func.func @_conv1x1_stats_kernel(%arg0: i32, %arg1: i32, %arg2: i32, %arg3: memref<1x4x256xf32, #tpu.memory_space<vmem>>, %arg4: memref<8x4xf32, #tpu.memory_space<vmem>>, %arg5: memref<1x1x8x1xf32, #tpu.memory_space<vmem>>, %arg6: memref<1x1x8x1xf32, #tpu.memory_space<vmem>>) attributes {dimension_semantics = [#tpu.dimension_semantics<parallel>, #tpu.dimension_semantics<parallel>, #tpu.dimension_semantics<arbitrary>], iteration_bounds = array<i64: 2, 1, 1>, scalar_prefetch = 0 : i64, scratch_operands = 0 : i64, tpu.core_type = #tpu.core_type<tc>, window_params = [{transform_indices = @transform_0, window_bounds = array<i64: 1, 4, 256>}, {pipeline_mode = #tpu.pipeline_mode<synchronous>, transform_indices = @transform_1, window_bounds = array<i64: 8, 4>}, {transform_indices = @transform_2, window_bounds = array<i64: 1, 1, 8, 1>}, {transform_indices = @transform_3, window_bounds = array<i64: 1, 1, 8, 1>}]} {
    %c0_i32 = arith.constant 0 : i32
    %0 = arith.cmpi eq, %arg2, %c0_i32 : i32
    %1 = arith.extui %0 : i1 to i32
    %c0_i32_0 = arith.constant 0 : i32
    %2 = arith.cmpi ne, %1, %c0_i32_0 : i32
    scf.if %2 {
      %cst_22 = arith.constant 0.000000e+00 : f32
      %46 = vector.broadcast %cst_22 : f32 to vector<8x1xf32>
      %c0_23 = arith.constant 0 : index
      %c0_24 = arith.constant 0 : index
      %c0_25 = arith.constant 0 : index
      %c0_26 = arith.constant 0 : index
      %47 = vector.load %arg5[%c0_23, %c0_24, %c0_25, %c0_26] : memref<1x1x8x1xf32, #tpu.memory_space<vmem>>, vector<1x1x8x1xf32>
      %48 = vector.shape_cast %47 : vector<1x1x8x1xf32> to vector<8x1xf32>
      %49 = vector.shape_cast %46 : vector<8x1xf32> to vector<1x1x8x1xf32>
      tpu.vector_store %arg5[%c0_23, %c0_24, %c0_25, %c0_26], %49 {strides = array<i32>} : memref<1x1x8x1xf32, #tpu.memory_space<vmem>>, vector<1x1x8x1xf32>,
      %cst_27 = arith.constant 0.000000e+00 : f32
      %50 = vector.broadcast %cst_27 : f32 to vector<8x1xf32>
      %c0_28 = arith.constant 0 : index
      %c0_29 = arith.constant 0 : index
      %c0_30 = arith.constant 0 : index
      %c0_31 = arith.constant 0 : index
      %51 = vector.load %arg6[%c0_28, %c0_29, %c0_30, %c0_31] : memref<1x1x8x1xf32, #tpu.memory_space<vmem>>, vector<1x1x8x1xf32>
      %52 = vector.shape_cast %51 : vector<1x1x8x1xf32> to vector<8x1xf32>
      %53 = vector.shape_cast %50 : vector<8x1xf32> to vector<1x1x8x1xf32>
      tpu.vector_store %arg6[%c0_28, %c0_29, %c0_30, %c0_31], %53 {strides = array<i32>} : memref<1x1x8x1xf32, #tpu.memory_space<vmem>>, vector<1x1x8x1xf32>,
    } else {
    }
    %c0 = arith.constant 0 : index
    %c0_1 = arith.constant 0 : index
    %3 = vector.load %arg4[%c0, %c0_1] : memref<8x4xf32, #tpu.memory_space<vmem>>, vector<8x4xf32>
    %c0_2 = arith.constant 0 : index
    %c0_3 = arith.constant 0 : index
    %c0_4 = arith.constant 0 : index
    %4 = vector.load %arg3[%c0_2, %c0_3, %c0_4] : memref<1x4x256xf32, #tpu.memory_space<vmem>>, vector<1x4x256xf32>
    %5 = vector.shape_cast %4 : vector<1x4x256xf32> to vector<4x256xf32>
    %6 = vector.extract_strided_slice %3 {offsets = [0, 0], sizes = [8, 1], strides = [1, 1]} : vector<8x4xf32> to vector<8x1xf32>
    %7 = vector.extract_strided_slice %5 {offsets = [0, 0], sizes = [1, 256], strides = [1, 1]} : vector<4x256xf32> to vector<1x256xf32>
    %8 = vector.broadcast %6 : vector<8x1xf32> to vector<8x256xf32>
    %9 = vector.broadcast %7 : vector<1x256xf32> to vector<8x256xf32>
    %10 = arith.mulf %8, %9 : vector<8x256xf32>
    %11 = vector.extract_strided_slice %3 {offsets = [0, 1], sizes = [8, 1], strides = [1, 1]} : vector<8x4xf32> to vector<8x1xf32>
    %12 = vector.extract_strided_slice %5 {offsets = [1, 0], sizes = [1, 256], strides = [1, 1]} : vector<4x256xf32> to vector<1x256xf32>
    %13 = vector.broadcast %11 : vector<8x1xf32> to vector<8x256xf32>
    %14 = vector.broadcast %12 : vector<1x256xf32> to vector<8x256xf32>
    %15 = arith.mulf %13, %14 : vector<8x256xf32>
    %16 = arith.addf %10, %15 : vector<8x256xf32>
    %17 = vector.extract_strided_slice %3 {offsets = [0, 2], sizes = [8, 1], strides = [1, 1]} : vector<8x4xf32> to vector<8x1xf32>
    %18 = vector.extract_strided_slice %5 {offsets = [2, 0], sizes = [1, 256], strides = [1, 1]} : vector<4x256xf32> to vector<1x256xf32>
    %19 = vector.broadcast %17 : vector<8x1xf32> to vector<8x256xf32>
    %20 = vector.broadcast %18 : vector<1x256xf32> to vector<8x256xf32>
    %21 = arith.mulf %19, %20 : vector<8x256xf32>
    %22 = arith.addf %16, %21 : vector<8x256xf32>
    %23 = vector.extract_strided_slice %3 {offsets = [0, 3], sizes = [8, 1], strides = [1, 1]} : vector<8x4xf32> to vector<8x1xf32>
    %24 = vector.extract_strided_slice %5 {offsets = [3, 0], sizes = [1, 256], strides = [1, 1]} : vector<4x256xf32> to vector<1x256xf32>
    %25 = vector.broadcast %23 : vector<8x1xf32> to vector<8x256xf32>
    %26 = vector.broadcast %24 : vector<1x256xf32> to vector<8x256xf32>
    %27 = arith.mulf %25, %26 : vector<8x256xf32>
    %28 = arith.addf %22, %27 : vector<8x256xf32>
    %c0_5 = arith.constant 0 : index
    %c0_6 = arith.constant 0 : index
    %c0_7 = arith.constant 0 : index
    %c0_8 = arith.constant 0 : index
    %29 = vector.load %arg5[%c0_5, %c0_6, %c0_7, %c0_8] : memref<1x1x8x1xf32, #tpu.memory_space<vmem>>, vector<1x1x8x1xf32>
    %30 = vector.shape_cast %29 : vector<1x1x8x1xf32> to vector<8x1xf32>
    %cst = arith.constant dense<0.000000e+00> : vector<8xf32>
    %31 = vector.multi_reduction <add>, %28, %cst [1] : vector<8x256xf32> to vector<8xf32>
    %32 = vector.shape_cast %31 : vector<8xf32> to vector<8x1xf32>
    %33 = arith.addf %30, %32 : vector<8x1xf32>
    %c0_9 = arith.constant 0 : index
    %c0_10 = arith.constant 0 : index
    %c0_11 = arith.constant 0 : index
    %c0_12 = arith.constant 0 : index
    %34 = vector.load %arg5[%c0_9, %c0_10, %c0_11, %c0_12] : memref<1x1x8x1xf32, #tpu.memory_space<vmem>>, vector<1x1x8x1xf32>
    %35 = vector.shape_cast %34 : vector<1x1x8x1xf32> to vector<8x1xf32>
    %36 = vector.shape_cast %33 : vector<8x1xf32> to vector<1x1x8x1xf32>
    tpu.vector_store %arg5[%c0_9, %c0_10, %c0_11, %c0_12], %36 {strides = array<i32>} : memref<1x1x8x1xf32, #tpu.memory_space<vmem>>, vector<1x1x8x1xf32>,
    %c0_13 = arith.constant 0 : index
    %c0_14 = arith.constant 0 : index
    %c0_15 = arith.constant 0 : index
    %c0_16 = arith.constant 0 : index
    %37 = vector.load %arg6[%c0_13, %c0_14, %c0_15, %c0_16] : memref<1x1x8x1xf32, #tpu.memory_space<vmem>>, vector<1x1x8x1xf32>
    %38 = vector.shape_cast %37 : vector<1x1x8x1xf32> to vector<8x1xf32>
    %39 = arith.mulf %28, %28 : vector<8x256xf32>
    %cst_17 = arith.constant dense<0.000000e+00> : vector<8xf32>
    %40 = vector.multi_reduction <add>, %39, %cst_17 [1] : vector<8x256xf32> to vector<8xf32>
    %41 = vector.shape_cast %40 : vector<8xf32> to vector<8x1xf32>
    %42 = arith.addf %38, %41 : vector<8x1xf32>
    %c0_18 = arith.constant 0 : index
    %c0_19 = arith.constant 0 : index
    %c0_20 = arith.constant 0 : index
    %c0_21 = arith.constant 0 : index
    %43 = vector.load %arg6[%c0_18, %c0_19, %c0_20, %c0_21] : memref<1x1x8x1xf32, #tpu.memory_space<vmem>>, vector<1x1x8x1xf32>
    %44 = vector.shape_cast %43 : vector<1x1x8x1xf32> to vector<8x1xf32>
    %45 = vector.shape_cast %42 : vector<8x1xf32> to vector<1x1x8x1xf32>
    tpu.vector_store %arg6[%c0_18, %c0_19, %c0_20, %c0_21], %45 {strides = array<i32>} : memref<1x1x8x1xf32, #tpu.memory_space<vmem>>, vector<1x1x8x1xf32>,
    return
  }
  func.func @transform_0(%arg0: i32, %arg1: i32, %arg2: i32) -> (i32, i32, i32) {
    %c1_i32 = arith.constant 1 : i32
    %0 = arith.muli %arg1, %c1_i32 : i32
    %1 = arith.addi %0, %arg2 : i32
    %c0_i32 = arith.constant 0 : i32
    %c0_i32_0 = arith.constant 0 : i32
    return %arg0, %c0_i32, %1 : i32, i32, i32
  }
  func.func @transform_1(%arg0: i32, %arg1: i32, %arg2: i32) -> (i32, i32) {
    %c0_i32 = arith.constant 0 : i32
    %c0_i32_0 = arith.constant 0 : i32
    %c0_i32_1 = arith.constant 0 : i32
    return %c0_i32, %c0_i32_0 : i32, i32
  }
  func.func @transform_2(%arg0: i32, %arg1: i32, %arg2: i32) -> (i32, i32, i32, i32) {
    %c0_i32 = arith.constant 0 : i32
    %c0_i32_0 = arith.constant 0 : i32
    %c0_i32_1 = arith.constant 0 : i32
    return %arg0, %arg1, %c0_i32, %c0_i32_0 : i32, i32, i32, i32
  }
  func.func @transform_3(%arg0: i32, %arg1: i32, %arg2: i32) -> (i32, i32, i32, i32) {
    %c0_i32 = arith.constant 0 : i32
    %c0_i32_0 = arith.constant 0 : i32
    %c0_i32_1 = arith.constant 0 : i32
    return %arg0, %arg1, %c0_i32, %c0_i32_0 : i32, i32, i32, i32
  }
}

</mosaic_0001>

<llo_original>
// kernel: tpu_custom_call.1
$region0: #{tpu_custom_call.1}
  #allocation0 [shape = 'u32[]', space=smem, size = 0x4, offset = 0x4, fixed_abs, tag = 'smem constant byte address 0x4 - core index']
  #allocation1 [shape = 'u32[72,128]{1,0:T(1,128)}', space=vmem, size = 0x9000, scoped, tag = 'internal scratch']
  %s0 = inlined_call_operand.hbm [shape: f32[2,4,256], index: 0, kind: input, shape index: {}]
  %s1 = inlined_call_operand.vmem [shape: f32[8,4], index: 1, kind: input, shape index: {}]
  %s2 = inlined_call_operand.vmem [shape: f32[2,1,8,1], index: 2, kind: output, shape index: {0}]
  %s3 = inlined_call_operand.vmem [shape: f32[2,1,8,1], index: 3, kind: output, shape index: {1}]
  %4 = xla_tuple %s2, %s3
  %s5 = sld [smem:[#allocation0]]
  $region57: #{tpu_custom_call.1} parent=0
    _
  %s7 = ssub.s32 1, %s5
  %s8 = scalar_select 0, %s7, %s5
  $region1: #{tpu_custom_call.1} parent=0
    #allocation2 [shape = 'u8[8192]{0}', space=vmem, size = 0x2000, scoped, tag = 'input window, operand 0']
    #allocation3 [shape = 's32[2]{0}', space=sflag, size = 0x8, scoped, tag = 'scoped memory for tpu_custom_call.1']
    %9 = vsyncpa [#allocation3], 0
    %s10 = scalar_lea.sflag [#allocation3], 1
    %11 = vsyncpa %s10, 0
    loop: start=0, step=1, limit=4
    $region2: #{tpu_custom_call.1} parent=1 // loop_pre_header
      _
    $region3: #{tpu_custom_call.1} parent=1 // loop_header
      %s13 = sphi 0, %s17
      %p14 = scmp.ge.s32.totalorder %s13, 4
      %s20 = sphi 0, %s39
      %s21 = sphi 0, %s35
      %s22 = sphi 0, %s31
      %s23 = sphi 0, %s20
      %s24 = sphi 0, %s21
      %s25 = sphi 0, %s22
      %s26 = sphi 0, %s23
      %s27 = sphi 0, %s24
      %s28 = sphi 0, %s25
      %s46 = sphi 0, %s48
      %s49 = sphi 0, %s46
      %s50 = sphi 0, %s49
      %s66 = sphi 0, %s50
      %s70 = sphi 0, %s70
      %s72 = sphi 0, %s70
      %s73 = sphi 0, %s72
      %s87 = sphi 0, %s73
      %s95 = sphi 0, %s97
      %s98 = sphi 0, %s95
      %s99 = sphi 0, %s98
      %s115 = sphi 0, %s99
      %s123 = sphi 0, %s125
      %s126 = sphi 0, %s123
      %s127 = sphi 0, %s126
      %s143 = sphi 0, %s127
    $region4: #{tpu_custom_call.1} parent=1 // loop_header_branch
      %16 = sbr.rel (%p14) target = $region8
    $region5: #{tpu_custom_call.1} parent=1 // loop_body
      %s18 = ssub.s32 %s13, 1
      %s19 = ssub.s32 %s13, 2
      %s29 = sadd.s32 1, %s22
      %p30 = scmp.ge.s32.totalorder %s29, 1
      %s31 = scalar_select %p30, 0, %s29
      %s32 = sadd.s32 1, %s21
      %s33 = scalar_select %p30, %s32, %s21
      %p34 = scmp.ge.s32.totalorder %s33, 1
      %s35 = scalar_select %p34, 0, %s33
      %s36 = sadd.s32 1, %s20
      %s37 = scalar_select %p34, %s36, %s20
      %p38 = scmp.ge.s32.totalorder %s37, 2
      %s39 = scalar_select %p38, 0, %s37
      %s40 = sadd.s32 %s21, %s22
      %s41 = sadd.s32 %s35, %s31
      %s42 = ssub.s32 %s20, %s39
      %s43 = ssub.s32 %s40, %s41
      %s44 = sor.u32 %s42, %s43
      %p45 = scmp.eq.s32.totalorder %s44, 0
      %s47 = sadd.s32 %s46, 1
      %s48 = scalar_select %p45, %s46, %s47
      %p51 = pneg %p45
      %p52 = scmp.eq.s32.totalorder %s13, 1
      %p53 = por %p51, %p52
      %p54 = scmp.ne.s32.totalorder %s46, %s49
      %p55 = scmp.eq.s32.totalorder %s13, 0
      %p56 = por %p54, %p55
      %p57 = scmp.ne.s32.totalorder %s46, %s49
      %p58 = scmp.eq.s32.totalorder %s18, 1
      %p59 = por %p57, %p58
      %p60 = scmp.ne.s32.totalorder %s49, %s50
      %p61 = scmp.eq.s32.totalorder %s18, 0
      %p62 = por %p60, %p61
      %p63 = scmp.ne.s32.totalorder %s49, %s50
      %p64 = scmp.eq.s32.totalorder %s19, 1
      %p65 = por %p63, %p64
      %p67 = scmp.ne.s32.totalorder %s50, %s66
      %p68 = scmp.eq.s32.totalorder %s19, 0
      %p69 = por %p67, %p68
      %s71 = sadd.s32 %s70, 1
      %p74 = scmp.eq.s32.totalorder %s13, 1
      %p75 = scmp.ne.s32.totalorder %s70, %s72
      %p76 = scmp.eq.s32.totalorder %s13, 0
      %p77 = por %p75, %p76
      %p78 = scmp.ne.s32.totalorder %s70, %s72
      %p79 = scmp.eq.s32.totalorder %s18, 1
      %p80 = por %p78, %p79
      %p81 = scmp.ne.s32.totalorder %s72, %s73
      %p82 = scmp.eq.s32.totalorder %s18, 0
      %p83 = por %p81, %p82
      %p84 = scmp.ne.s32.totalorder %s72, %s73
      %p85 = scmp.eq.s32.totalorder %s19, 1
      %p86 = por %p84, %p85
      %p88 = scmp.ne.s32.totalorder %s73, %s87
      %p89 = scmp.eq.s32.totalorder %s19, 0
      %p90 = por %p88, %p89
      %s91 = ssub.s32 %s20, %s39
      %s92 = ssub.s32 %s21, %s35
      %s93 = sor.u32 %s91, %s92
      %p94 = scmp.eq.s32.totalorder %s93, 0
      %s96 = sadd.s32 %s95, 1
      %s97 = scalar_select %p94, %s95, %s96
      %p100 = pneg %p94
      %p101 = scmp.eq.s32.totalorder %s13, 1
      %p102 = por %p100, %p101
      %p103 = scmp.ne.s32.totalorder %s95, %s98
      %p104 = scmp.eq.s32.totalorder %s13, 0
      %p105 = por %p103, %p104
      %p106 = scmp.ne.s32.totalorder %s95, %s98
      %p107 = scmp.eq.s32.totalorder %s18, 1
      %p108 = por %p106, %p107
      %p109 = scmp.ne.s32.totalorder %s98, %s99
      %p110 = scmp.eq.s32.totalorder %s18, 0
      %p111 = por %p109, %p110
      %p112 = scmp.ne.s32.totalorder %s98, %s99
      %p113 = scmp.eq.s32.totalorder %s19, 1
      %p114 = por %p112, %p113
      %p116 = scmp.ne.s32.totalorder %s99, %s115
      %p117 = scmp.eq.s32.totalorder %s19, 0
      %p118 = por %p116, %p117
      %s119 = ssub.s32 %s20, %s39
      %s120 = ssub.s32 %s21, %s35
      %s121 = sor.u32 %s119, %s120
      %p122 = scmp.eq.s32.totalorder %s121, 0
      %s124 = sadd.s32 %s123, 1
      %s125 = scalar_select %p122, %s123, %s124
      %p128 = pneg %p122
      %p129 = scmp.eq.s32.totalorder %s13, 1
      %p130 = por %p128, %p129
      %p131 = scmp.ne.s32.totalorder %s123, %s126
      %p132 = scmp.eq.s32.totalorder %s13, 0
      %p133 = por %p131, %p132
      %p134 = scmp.ne.s32.totalorder %s123, %s126
      %p135 = scmp.eq.s32.totalorder %s18, 1
      %p136 = por %p134, %p135
      %p137 = scmp.ne.s32.totalorder %s126, %s127
      %p138 = scmp.eq.s32.totalorder %s18, 0
      %p139 = por %p137, %p138
      %p140 = scmp.ne.s32.totalorder %s126, %s127
      %p141 = scmp.eq.s32.totalorder %s19, 1
      %p142 = por %p140, %p141
      %p144 = scmp.ne.s32.totalorder %s127, %s143
      %p145 = scmp.eq.s32.totalorder %s19, 0
      %p146 = por %p144, %p145
      %p147 = scmp.le.s32.totalorder 1, %s13
      %p148 = scmp.lt.s32.totalorder %s13, 3
      %p149 = pnand %p147, %p148
      %p150 = pneg %p149
      // Predicated region
      $region9: #{tpu_custom_call.1} parent=5 // pred_check
        _
      $region10: #{tpu_custom_call.1} parent=5 // pred_check_branch
        %152 = sbr.rel (%p149) target = $region12
      $region11: #{tpu_custom_call.1} parent=5 // pred_region
        %s153 = ssub.s32 %s13, 1
        // Predicated region
        $region13: #{tpu_custom_call.1} parent=11 // pred_check
          %p154 = pneg %p83
        $region14: #{tpu_custom_call.1} parent=11 // pred_check_branch
          %156 = sbr.rel (%p154) target = $region16
        $region15: #{tpu_custom_call.1} parent=11 // pred_region
          _
        $region16: #{tpu_custom_call.1} parent=11 // pred_fallthru
          _
      $region12: #{tpu_custom_call.1} parent=5 // pred_fallthru
        _
      %p157 = scmp.lt.s32.totalorder %s13, 2
      // Predicated region
      $region17: #{tpu_custom_call.1} parent=5 // pred_check
        %p158 = pneg %p157
      $region18: #{tpu_custom_call.1} parent=5 // pred_check_branch
        %160 = sbr.rel (%p158) target = $region20
      $region19: #{tpu_custom_call.1} parent=5 // pred_region
        // Predicated region
        $region21: #{tpu_custom_call.1} parent=19 // pred_check
          %p161 = pneg %p56
        $region22: #{tpu_custom_call.1} parent=19 // pred_check_branch
          %163 = sbr.rel (%p161) target = $region24
        $region23: #{tpu_custom_call.1} parent=19 // pred_region
          %s164 = sand.u32 %s46, 1
          %s165 = scalar_lea.sflag [#allocation3], %s164
          %s166 = sand.u32 %s46, 1
          %s167 = smul.addr %s166, 8
          %s168 = scalar_lea.vmem [#allocation2], %s167
          %s169 = sadd.s32 %s21, %s22
          %s170 = smul.u32 2, %s169
          %172 = vsyncadd %s165, 0
          %s173 = smul.addr %s20, 2
          %s174 = sadd.s32 %s170, %s173
          %s175 = smul.addr %s174, 4
          %s176 = scalar_lea.hbm %s0, %s175
          %s178 = sshll.u32 %s176, 4
          %s179 = int_to_ptr.hbm [resolvable:$true] %s178
          %s180 = sshll.u32 %s168, 4
          %s181 = int_to_ptr.vmem [resolvable:$true] %s180
          %183 = dma.hbm_to_vmem [thread:$0]  %s179, 128, %s181, %s165
        $region24: #{tpu_custom_call.1} parent=19 // pred_fallthru
          _
      $region20: #{tpu_custom_call.1} parent=5 // pred_fallthru
        _
      %p184 = scmp.le.s32.totalorder 1, %s13
      %p185 = scmp.lt.s32.totalorder %s13, 3
      %p186 = pnand %p184, %p185
      %p187 = pneg %p186
      // Predicated region
      $region25: #{tpu_custom_call.1} parent=5 // pred_check
        _
      $region26: #{tpu_custom_call.1} parent=5 // pred_check_branch
        %189 = sbr.rel (%p186) target = $region28
      $region27: #{tpu_custom_call.1} parent=5 // pred_region
        %s190 = ssub.s32 %s13, 1
        %s191 = sand.u32 %s49, 1
        %s192 = scalar_lea.sflag [#allocation3], %s191
        %s193 = sand.u32 %s49, 1
        %s194 = smul.addr %s193, 8
        %s195 = scalar_lea.vmem [#allocation2], %s194
        // Predicated region
        $region29: #{tpu_custom_call.1} parent=27 // pred_check
          %p196 = pneg %p62
        $region30: #{tpu_custom_call.1} parent=27 // pred_check_branch
          %198 = sbr.rel (%p196) target = $region32
        $region31: #{tpu_custom_call.1} parent=27 // pred_region
          %200 = dma.done %s192, 128
        $region32: #{tpu_custom_call.1} parent=27 // pred_fallthru
          _
        %s201 = sand.u32 %s49, 1
        %s202 = scalar_lea.sflag [#allocation3], %s201
        %s203 = sand.u32 %s49, 1
        %s204 = smul.addr %s203, 8
        %s205 = scalar_lea.vmem [#allocation2], %s204
        %p206 = pneg %p62
        %p207 = pneg %p59
        %p208 = pneg %p83
        %p209 = pneg %p80
        %p210 = pneg %p111
        %p211 = pneg %p108
        %p212 = scmp.lt.s32.totalorder %s23, 1
        %s213 = scalar_select %p212, %s23, 1
        %p214 = scmp.lt.s32.totalorder %s24, 0
        %s215 = scalar_select %p214, %s24, 0
        %s216 = sadd.s32 %s215, %s213
        %s217 = smul.addr %s216, 8
        %s218 = scalar_lea.vmem %s2, %s217
        %p219 = pneg %p139
        %p220 = pneg %p136
        %p221 = scmp.lt.s32.totalorder %s23, 1
        %s222 = scalar_select %p221, %s23, 1
        %p223 = scmp.lt.s32.totalorder %s24, 0
        %s224 = scalar_select %p223, %s24, 0
        %s225 = sadd.s32 %s224, %s222
        %s226 = smul.addr %s225, 8
        %s227 = scalar_lea.vmem %s3, %s226
        %s228 = sadd.s32 %s24, %s25
        %s229 = smul.u32 2, %s228
        %p230 = scmp.lt.s32.totalorder %s23, 1
        %s231 = scalar_select %p230, %s23, 1
        %p232 = scmp.lt.s32.totalorder %s24, 0
        %s233 = scalar_select %p232, %s24, 0
        %s234 = sadd.s32 %s233, %s231
        %s235 = smul.addr %s234, 8
        %s236 = scalar_lea.vmem %s2, %s235
        %p237 = scmp.lt.s32.totalorder %s23, 1
        %s238 = scalar_select %p237, %s23, 1
        %p239 = scmp.lt.s32.totalorder %s24, 0
        %s240 = scalar_select %p239, %s24, 0
        %s241 = sadd.s32 %s240, %s238
        %s242 = smul.addr %s241, 8
        %s243 = scalar_lea.vmem %s3, %s242
        %p244 = scmp.eq.s32.totalorder %s25, 0
        // Predicated region
        $region33: #{tpu_custom_call.1} parent=27 // pred_check
          %p245 = pneg %p244
        $region34: #{tpu_custom_call.1} parent=27 // pred_check_branch
          %247 = sbr.rel (%p245) target = $region36
        $region35: #{tpu_custom_call.1} parent=27 // pred_region
          %vm248 = vcmask 7168
          %249 = vst.msk [vmem:[%s236] sm:$0xff] %vm248, 0.0
          %250 = vst.msk [vmem:[%s243] sm:$0xff] %vm248, 0.0
        $region36: #{tpu_custom_call.1} parent=27 // pred_fallthru
          _
        %v251 = vld [vmem:[%s1] sm:$0xff]
        %v252 = vld [vmem:[%s195] sm:$0xff]
        %254 = vset.pattern.permute.xlu0 0
        %255 = vperm.xlu0 %254, %v251
        %v256 = vpop.permute.xlu0 %255
        %v259 = vperm.slane %v252, 0
        %v260 = vperm.slane %v252, 4
        %v263 = vperm.slane %v259, 0
        %v264 = vperm.slane %v260, 0
        %v265 = vmul.f32 %v256, %v263
        %v266 = vmul.f32 %v256, %v264
        %267 = vset.pattern.permute.xlu0 1
        %268 = vperm.xlu0 %267, %v251
        %v269 = vpop.permute.xlu0 %268
        %v271 = vperm.slane %v252, 1
        %v272 = vperm.slane %v252, 5
        %v275 = vperm.slane %v271, 1
        %v276 = vperm.slane %v272, 1
        %v277 = vmul.f32 %v269, %v275
        %v278 = vmul.f32 %v269, %v276
        %v279 = vadd.f32 %v265, %v277
        %v280 = vadd.f32 %v266, %v278
        %281 = vset.pattern.permute.xlu0 2
        %282 = vperm.xlu0 %281, %v251
        %v283 = vpop.permute.xlu0 %282
        %v285 = vperm.slane %v252, 2
        %v286 = vperm.slane %v252, 6
        %v289 = vperm.slane %v285, 2
        %v290 = vperm.slane %v286, 2
        %v291 = vmul.f32 %v283, %v289
        %v292 = vmul.f32 %v283, %v290
        %v293 = vadd.f32 %v279, %v291
        %v294 = vadd.f32 %v280, %v292
        %295 = vset.pattern.permute.xlu0 3
        %296 = vperm.xlu0 %295, %v251
        %v297 = vpop.permute.xlu0 %296
        %v299 = vperm.slane %v252, 3
        %v300 = vperm.slane %v252, 7
        %v303 = vperm.slane %v299, 3
        %v304 = vperm.slane %v300, 3
        %v305 = vmul.f32 %v297, %v303
        %v306 = vmul.f32 %v297, %v304
        %v307 = vadd.f32 %v293, %v305
        %v308 = vadd.f32 %v294, %v306
        %v309 = vld [vmem:[%s236] sm:$0xff]
        %v310 = vadd.f32 %v307, %v308
        %311 = vadd.xlane.f32.xlu0 %v310
        %v312 = vpop.xlane.xlu0 %311
        %v313 = vadd.f32 %v309, %v312
        %vm314 = vcmask 7168
        %315 = vst.msk [vmem:[%s236] sm:$0xff] %vm314, %v313
        %v316 = vld [vmem:[%s243] sm:$0xff]
        %v317 = vmul.f32 %v307, %v307
        %v318 = vmul.f32 %v308, %v308
        %v319 = vadd.f32 %v317, %v318
        %320 = vadd.xlane.f32.xlu0 %v319
        %v321 = vpop.xlane.xlu0 %320
        %v322 = vadd.f32 %v316, %v321
        %323 = vst.msk [vmem:[%s243] sm:$0xff] %vm314, %v322
        %p324 = scmp.lt.s32.totalorder %s23, 1
        %s325 = scalar_select %p324, %s23, 1
        %p326 = scmp.lt.s32.totalorder %s24, 0
        %s327 = scalar_select %p326, %s24, 0
        %s328 = sadd.s32 %s327, %s325
        %s329 = smul.addr %s328, 8
        %s330 = scalar_lea.vmem %s2, %s329
        %p331 = scmp.lt.s32.totalorder %s23, 1
        %s332 = scalar_select %p331, %s23, 1
        %p333 = scmp.lt.s32.totalorder %s24, 0
        %s334 = scalar_select %p333, %s24, 0
        %s335 = sadd.s32 %s334, %s332
        %s336 = smul.addr %s335, 8
        %s337 = scalar_lea.vmem %s3, %s336
        // Predicated region
        $region37: #{tpu_custom_call.1} parent=27 // pred_check
          %p338 = pneg %p108
        $region38: #{tpu_custom_call.1} parent=27 // pred_check_branch
          %340 = sbr.rel (%p338) target = $region40
        $region39: #{tpu_custom_call.1} parent=27 // pred_region
          _
        $region40: #{tpu_custom_call.1} parent=27 // pred_fallthru
          _
        // Predicated region
        $region41: #{tpu_custom_call.1} parent=27 // pred_check
          %p341 = pneg %p136
        $region42: #{tpu_custom_call.1} parent=27 // pred_check_branch
          %343 = sbr.rel (%p341) target = $region44
        $region43: #{tpu_custom_call.1} parent=27 // pred_region
          _
        $region44: #{tpu_custom_call.1} parent=27 // pred_fallthru
          _
      $region28: #{tpu_custom_call.1} parent=5 // pred_fallthru
        _
      %p344 = scmp.le.s32.totalorder 2, %s13
      // Predicated region
      $region45: #{tpu_custom_call.1} parent=5 // pred_check
        %p345 = pneg %p344
      $region46: #{tpu_custom_call.1} parent=5 // pred_check_branch
        %347 = sbr.rel (%p345) target = $region48
      $region47: #{tpu_custom_call.1} parent=5 // pred_region
        %s348 = ssub.s32 %s13, 2
        // Predicated region
        $region49: #{tpu_custom_call.1} parent=47 // pred_check
          %p349 = pneg %p114
        $region50: #{tpu_custom_call.1} parent=47 // pred_check_branch
          %351 = sbr.rel (%p349) target = $region52
        $region51: #{tpu_custom_call.1} parent=47 // pred_region
          %p352 = scmp.lt.s32.totalorder %s26, 1
          %s353 = scalar_select %p352, %s26, 1
          %p354 = scmp.lt.s32.totalorder %s27, 0
          %s355 = scalar_select %p354, %s27, 0
          %s356 = sadd.s32 %s355, %s353
          %s357 = smul.addr %s356, 8
          %s358 = scalar_lea.vmem %s2, %s357
        $region52: #{tpu_custom_call.1} parent=47 // pred_fallthru
          _
        // Predicated region
        $region53: #{tpu_custom_call.1} parent=47 // pred_check
          %p359 = pneg %p142
        $region54: #{tpu_custom_call.1} parent=47 // pred_check_branch
          %361 = sbr.rel (%p359) target = $region56
        $region55: #{tpu_custom_call.1} parent=47 // pred_region
          %p362 = scmp.lt.s32.totalorder %s26, 1
          %s363 = scalar_select %p362, %s26, 1
          %p364 = scmp.lt.s32.totalorder %s27, 0
          %s365 = scalar_select %p364, %s27, 0
          %s366 = sadd.s32 %s365, %s363
          %s367 = smul.addr %s366, 8
          %s368 = scalar_lea.vmem %s3, %s367
        $region56: #{tpu_custom_call.1} parent=47 // pred_fallthru
          _
      $region48: #{tpu_custom_call.1} parent=5 // pred_fallthru
        _
    $region6: #{tpu_custom_call.1} parent=1 // loop_footer
      %s17 = sadd.s32 1, %s13
    $region7: #{tpu_custom_call.1} parent=1 // loop_footer_branch
      %12 = sbr.rel target = $region3
    $region8: #{tpu_custom_call.1} parent=1 // loop_exit
      _
    %369 = vsyncpa [#allocation3], 1
    %s370 = scalar_lea.sflag [#allocation3], 1
    %371 = vsyncpa %s370, 1

</llo_original>
